<compile_context>
chip_gen: v5e
topology: v5e:2x2
jax: 0.10.0
libtpu: 0.0.40
codegen_flags: <defaults>
</compile_context>

<pallas_src>
import jax
import jax.numpy as jnp
from jax import lax
from jax.experimental import pallas as pl
from jax.experimental.pallas import tpu as pltpu


# ----------------------------------------------------------------------------
# Kernel 1: hoisted LSTM input projection for all timesteps (bf16 MXU matmul).
#   x2d: (T*B, E) bf16, w: (E, 8H) bf16 = [wih_f | wih_b], b: (1, 8H) f32 = [b_f | b_b]
# ----------------------------------------------------------------------------
def input_proj_kernel(x_ref, w_ref, b_ref, o_ref):
    o_ref[...] = (jnp.dot(x_ref[...], w_ref[...],
                          preferred_element_type=jnp.float32) + b_ref[...])


# ----------------------------------------------------------------------------
# Kernel 2: fused BiLSTM recurrence + hidden2tag + CRF (NLL and Viterbi decode).
# ----------------------------------------------------------------------------
def bilstm_crf_kernel(xproj_ref, mask_ref, tags_ref,
                      whh_f_ref, whh_b_ref,
                      w2t_f_ref, w2t_b_ref, b2t_ref,
                      start_ref, end_ref, trans_ref, trans_t_ref,
                      llh_ref, pred_ref,
                      feats_ref, hist_ref):
    T, B, G = xproj_ref.shape            # G = 8H  (fwd 4H | bwd 4H)
    H = whh_f_ref.shape[0]
    NP = trans_ref.shape[0]              # lane-padded tag count (multiple of 128)
    G2 = 4 * H

    whh_f = whh_f_ref[...]
    whh_b = whh_b_ref[...]
    w2t_f = w2t_f_ref[...]
    w2t_b = w2t_b_ref[...]
    start = start_ref[...]               # (1, NP)
    end = end_ref[...]                   # (1, NP)
    trans = trans_ref[...]               # (NP, NP)
    trans_t = trans_t_ref[...]           # (NP, NP) = trans.T (precomputed in wrapper)

    # ---------------- BiLSTM (merged fwd/bwd) fused with hidden2tag ----------
    # feats starts at the hidden2tag bias; each direction accumulates its half.
    feats_ref[...] = jnp.broadcast_to(b2t_ref[...], (T, B, NP))

    def lstm_gates(g, c):
        i = jax.nn.sigmoid(g[:, 0:H])
        f = jax.nn.sigmoid(g[:, H:2 * H])
        gg = jnp.tanh(g[:, 2 * H:3 * H])
        o = jax.nn.sigmoid(g[:, 3 * H:4 * H])
        c_new = f * c + i * gg
        return o * jnp.tanh(c_new), c_new

    zeros = jnp.zeros((B, H), jnp.float32)

    def lstm_body(t, carry):
        h_f, c_f, h_b, c_b = carry
        tb = T - 1 - t
        # forward direction at step t (input proj + biases precomputed)
        m_f = mask_ref[t]                                        # (B, 1)
        x_f = xproj_ref[t]                                       # (B, 8H)
        g_f = x_f[:, 0:G2] + jnp.dot(h_f, whh_f,
                                     preferred_element_type=jnp.float32)
        h_f, c_f = lstm_gates(g_f, c_f)
        feats_ref[t] += jnp.dot(h_f * m_f, w2t_f,
                                preferred_element_type=jnp.float32)
        # backward direction at step tb; state frozen on padded steps
        m_b = mask_ref[tb]
        x_b = xproj_ref[tb]
        g_b = x_b[:, G2:G] + jnp.dot(h_b, whh_b,
                                     preferred_element_type=jnp.float32)
        h_bn, c_bn = lstm_gates(g_b, c_b)
        h_b = m_b * h_bn + (1.0 - m_b) * h_b
        c_b = m_b * c_bn + (1.0 - m_b) * c_b
        feats_ref[tb] += jnp.dot(h_b * m_b, w2t_b,
                                 preferred_element_type=jnp.float32)
        return (h_f, c_f, h_b, c_b)

    lax.fori_loop(0, T, lstm_body, (zeros, zeros, zeros, zeros))

    # ---------------- CRF -----------------------------------------------------
    lane2 = lax.broadcasted_iota(jnp.int32, (B, NP), 1)
    fiota2 = lane2.astype(jnp.float32)

    def onehot(tag_col):                                         # (B,1) -> (B,NP)
        return (tag_col == lane2).astype(jnp.float32)

    emis = feats_ref[...]                                        # (T, B, NP)
    mask_all = mask_ref[...]                                     # (T, B, 1)
    tags_all = tags_ref[...]                                     # (T, B, 1) int32

    # numerator: emission / start / end terms vectorized over T (no serial loop)
    lane3 = lax.broadcasted_iota(jnp.int32, (T, B, NP), 2)
    oh_all = (tags_all == lane3).astype(jnp.float32)             # (T, B, NP)
    em_sc = jnp.sum(emis * oh_all, axis=2, keepdims=True)        # (T, B, 1)
    num = jnp.sum(em_sc * mask_all, axis=0)                      # (B, 1)
    num = num + jnp.sum(start * oh_all[0], axis=1, keepdims=True)
    lens = jnp.sum(mask_all, axis=0, keepdims=True)              # (1, B, 1)
    t_iota = lax.broadcasted_iota(jnp.int32, (T, B, 1), 0).astype(jnp.float32)
    last_ind = (t_iota == (lens - 1.0)).astype(jnp.float32)      # (T, B, 1)
    last_oh = jnp.sum(oh_all * last_ind, axis=0)                 # (B, NP)
    num = num + jnp.sum(end * last_oh, axis=1, keepdims=True)

    # numerator transition term rides inside the log-partition serial scan
    mxt = jnp.max(trans, axis=0, keepdims=True)                  # (1, NP)
    et = jnp.exp(trans - mxt)                                    # (NP, NP)
    alpha0 = start + emis[0]                                     # (B, NP)
    oh0 = onehot(tags_ref[0])

    def crf_fwd(i, carry):
        alpha, num_acc, oh_prev = carry
        m = mask_ref[i]                                          # (B, 1)
        em = feats_ref[i]                                        # (B, NP)
        oh_cur = onehot(tags_ref[i])
        tr = jnp.sum(jnp.dot(oh_prev, trans,
                             preferred_element_type=jnp.float32) * oh_cur,
                     axis=1, keepdims=True)
        num_acc = num_acc + tr * m
        mxa = jnp.max(alpha, axis=1, keepdims=True)
        ea = jnp.exp(alpha - mxa)
        z = jnp.maximum(jnp.dot(ea, et, preferred_element_type=jnp.float32),
                        1e-37)                                   # underflow guard
        nxt = jnp.log(z) + mxa + mxt + em
        alpha = jnp.where(m > 0.5, nxt, alpha)
        return (alpha, num_acc, oh_cur)

    alpha, num, _ = lax.fori_loop(1, T, crf_fwd, (alpha0, num, oh0))
    alpha = alpha + end
    mxa = jnp.max(alpha, axis=1, keepdims=True)
    denom = jnp.log(jnp.sum(jnp.exp(alpha - mxa), axis=1, keepdims=True)) + mxa
    llh_ref[...] = num - denom                                   # (B, 1) per-sequence llh

    # Viterbi decode (unmasked, matching crf.decode(lstm_feats))
    piota3 = lax.broadcasted_iota(jnp.int32, (B, NP, NP), 2).astype(jnp.float32)

    def vit_body(i, score):
        em = feats_ref[i]                                        # (B, NP)
        cand = score[:, None, :] + trans_t[None, :, :]           # (B, next, prev)
        best_val = jnp.max(cand, axis=2)                         # (B, NP)
        best_idx = jnp.min(
            jnp.where(cand == best_val[:, :, None], piota3, float(NP)), axis=2)
        hist_ref[i] = best_idx
        return best_val + em

    score = lax.fori_loop(1, T, vit_body, start + emis[0])
    score = score + end
    mx = jnp.max(score, axis=1, keepdims=True)
    best = jnp.min(jnp.where(score == mx, fiota2, float(NP)), axis=1, keepdims=True)
    pred_ref[T - 1] = best.astype(jnp.int32)

    def back_body(k, best_cur):
        t = T - 1 - k
        h = hist_ref[t + 1]                                      # (B, NP) f32 indices
        ohb = (fiota2 == best_cur).astype(jnp.float32)
        new_best = jnp.sum(h * ohb, axis=1, keepdims=True)
        pred_ref[t] = new_best.astype(jnp.int32)
        return new_best

    lax.fori_loop(1, T, back_body, best)


# ----------------------------------------------------------------------------
# Wrappers
# ----------------------------------------------------------------------------
def _full_spec(shape):
    nd = len(shape)
    return pl.BlockSpec(shape, lambda i, _nd=nd: (0,) * _nd)


def run_input_proj(x2d, w, b):
    TB, _E = x2d.shape
    G = w.shape[1]
    args = (x2d, w, b)
    return pl.pallas_call(
        input_proj_kernel,
        grid=(1,),
        in_specs=[_full_spec(a.shape) for a in args],
        out_specs=_full_spec((TB, G)),
        out_shape=jax.ShapeDtypeStruct((TB, G), jnp.float32),
        compiler_params=pltpu.CompilerParams(dimension_semantics=("arbitrary",)),
    )(*args)


def run_bilstm_crf(xproj, mask_t, tags_t, whh_f, whh_b,
                   w2t_f, w2t_b, b2t, start, end, trans, trans_t):
    T, B, _G = xproj.shape
    NP = trans.shape[0]
    args = (xproj, mask_t, tags_t, whh_f, whh_b,
            w2t_f, w2t_b, b2t, start, end, trans, trans_t)
    return pl.pallas_call(
        bilstm_crf_kernel,
        grid=(1,),
        in_specs=[_full_spec(a.shape) for a in args],
        out_specs=(_full_spec((B, 1)), _full_spec((T, B, 1))),
        out_shape=(jax.ShapeDtypeStruct((B, 1), jnp.float32),
                   jax.ShapeDtypeStruct((T, B, 1), jnp.int32)),
        scratch_shapes=[pltpu.VMEM((T, B, NP), jnp.float32),   # feats (emissions)
                        pltpu.VMEM((T, B, NP), jnp.float32)],  # viterbi history
        compiler_params=pltpu.CompilerParams(dimension_semantics=("arbitrary",)),
    )(*args)


def bilstm_crf_forward(params, sentence, tags, padding_mask):
    """Mirrors BiLSTM_CRF.forward: returns (loss, predict)."""
    B, T = sentence.shape
    H = params["whh_f"].shape[0]
    N = params["w2t"].shape[1]
    NP = ((N + 127) // 128) * 128            # lane-padded tag dimension
    NEG = -1e30

    # embedding lookup (glue, plain JAX gather), then time-major transpose
    embeds = jnp.take(params["emb"], sentence, axis=0)                 # (B, T, E)
    embeds_t = jnp.transpose(embeds, (1, 0, 2)).astype(jnp.float32)    # (T, B, E)

    # hoisted input projection for both directions in ONE bf16 MXU matmul
    emb2d = embeds_t.reshape(T * B, -1).astype(jnp.bfloat16)
    wih_cat = jnp.concatenate([params["wih_f"], params["wih_b"]],
                              axis=1).astype(jnp.bfloat16)             # (E, 8H)
    b_cat = jnp.concatenate([params["b_f"], params["b_b"]],
                            axis=1).astype(jnp.float32)                # (1, 8H)
    xproj = run_input_proj(emb2d, wih_cat, b_cat).reshape(T, B, 8 * H)

    mask_t = padding_mask.T.astype(jnp.float32)[:, :, None]            # (T, B, 1)
    tags_t = tags.T.astype(jnp.int32)[:, :, None]                      # (T, B, 1)

    # lane-pad the tag dimension: zero emissions, -1e30 transitions for padded tags
    pad_n = NP - N
    w2t = params["w2t"].astype(jnp.float32)
    w2t_f = jnp.pad(w2t[:H], ((0, 0), (0, pad_n)))
    w2t_b = jnp.pad(w2t[H:], ((0, 0), (0, pad_n)))
    b2t = jnp.pad(params["b2t"].astype(jnp.float32), ((0, 0), (0, pad_n)))
    start = jnp.pad(params["start"].astype(jnp.float32), ((0, 0), (0, pad_n)),
                    constant_values=NEG)
    end = jnp.pad(params["end"].astype(jnp.float32), ((0, 0), (0, pad_n)),
                  constant_values=NEG)
    trans = jnp.pad(params["trans"].astype(jnp.float32),
                    ((0, pad_n), (0, pad_n)), constant_values=NEG)
    trans_t = trans.T

    llh, pred = run_bilstm_crf(xproj, mask_t, tags_t,
                               params["whh_f"].astype(jnp.float32),
                               params["whh_b"].astype(jnp.float32),
                               w2t_f, w2t_b, b2t, start, end, trans, trans_t)

    loss = -jnp.sum(llh) / B                       # CRF reduction='sum', then -llh/bs
    predict = pred[:, :, 0].T.astype(jnp.int32)    # (B, T)
    predict = predict * padding_mask.astype(jnp.int32)   # predict_mask = padding_mask
    return loss, predict


# ----------------------------------------------------------------------------
# TODO(synk): batch-parallel megacore split (v7x) and T-chunked DMA pipelining are
# skipped at this toy size (B=2 violates the (8,128) sub-block rule; everything fits VMEM).
if __name__ == "__main__":
    vocab_size = 20
    tag_to_ix = {"O": 0, "B-PER": 1, "I-PER": 2, "B-LOC": 3, "I-LOC": 4}
    n_tags = len(tag_to_ix)
    embedding_dim = 16
    hidden_dim = 32
    H = hidden_dim // 2
    B, T = 2, 8

    key = jax.random.PRNGKey(0)
    ks = jax.random.split(key, 16)

    def unif(k, shape, s):
        return jax.random.uniform(k, shape, jnp.float32, -s, s)

    s_lstm = 1.0 / (H ** 0.5)
    s_lin = 1.0 / (hidden_dim ** 0.5)
    params = {
        "emb":   jax.random.normal(ks[0], (vocab_size, embedding_dim), jnp.float32),
        # LSTM weights stored transposed for x @ W; bias = b_ih + b_hh combined.
        "wih_f": unif(ks[1], (embedding_dim, 4 * H), s_lstm),
        "whh_f": unif(ks[2], (H, 4 * H), s_lstm),
        "b_f":   unif(ks[3], (1, 4 * H), s_lstm),
        "wih_b": unif(ks[4], (embedding_dim, 4 * H), s_lstm),
        "whh_b": unif(ks[5], (H, 4 * H), s_lstm),
        "b_b":   unif(ks[6], (1, 4 * H), s_lstm),
        "w2t":   unif(ks[7], (hidden_dim, n_tags), s_lin),
        "b2t":   unif(ks[8], (1, n_tags), s_lin),
        "start": unif(ks[9], (1, n_tags), 0.1),
        "end":   unif(ks[10], (1, n_tags), 0.1),
        "trans": unif(ks[11], (n_tags, n_tags), 0.1),
    }

    sentence = jax.random.randint(ks[12], (B, T), 0, vocab_size, dtype=jnp.int32)
    tags = jax.random.randint(ks[13], (B, T), 1, n_tags, dtype=jnp.int32)
    padding_mask = jnp.array([[1, 1, 1, 1, 1, 1, 1, 1],
                              [1, 1, 1, 1, 1, 0, 0, 0]], dtype=jnp.int32)
    tags = tags * padding_mask  # zero tags at padded positions

    loss, predict = bilstm_crf_forward(params, sentence, tags, padding_mask)
    loss = jax.block_until_ready(loss)
    predict = jax.block_until_ready(predict)

    assert predict.shape == (B, T)
    assert bool(jnp.isfinite(loss))
    print("KERNEL_OK")
</pallas_src>

<mosaic_0001>
module attributes {stable_mosaic.version = 11 : i64} {
  func.func @input_proj_kernel(%arg0: i32, %arg1: memref<16x16xbf16, #tpu.memory_space<vmem>>, %arg2: memref<16x128xbf16, #tpu.memory_space<vmem>>, %arg3: memref<1x128xf32, #tpu.memory_space<vmem>>, %arg4: memref<16x128xf32, #tpu.memory_space<vmem>>) attributes {dimension_semantics = [#tpu.dimension_semantics<arbitrary>], iteration_bounds = array<i64: 1>, scalar_prefetch = 0 : i64, scratch_operands = 0 : i64, tpu.core_type = #tpu.core_type<tc>, window_params = [{pipeline_mode = #tpu.pipeline_mode<synchronous>, transform_indices = @transform_0, window_bounds = array<i64: 16, 16>}, {pipeline_mode = #tpu.pipeline_mode<synchronous>, transform_indices = @transform_1, window_bounds = array<i64: 16, 128>}, {pipeline_mode = #tpu.pipeline_mode<synchronous>, transform_indices = @transform_2, window_bounds = array<i64: 1, 128>}, {pipeline_mode = #tpu.pipeline_mode<synchronous>, transform_indices = @transform_3, window_bounds = array<i64: 16, 128>}]} {
    %c0 = arith.constant 0 : index
    %c0_0 = arith.constant 0 : index
    %0 = vector.load %arg1[%c0, %c0_0] : memref<16x16xbf16, #tpu.memory_space<vmem>>, vector<16x16xbf16>
    %c0_1 = arith.constant 0 : index
    %c0_2 = arith.constant 0 : index
    %1 = vector.load %arg2[%c0_1, %c0_2] : memref<16x128xbf16, #tpu.memory_space<vmem>>, vector<16x128xbf16>
    %cst = arith.constant dense<0.000000e+00> : vector<16x128xf32>
    %2 = tpu.matmul %0, %1, %cst {dimension_numbers = #tpu.dot_dimension_numbers<[1], [0], [0], [1], [0, 0, 1, 1], [], []>} : vector<16x16xbf16>, vector<16x128xbf16>, vector<16x128xf32> -> vector<16x128xf32>
    %c0_3 = arith.constant 0 : index
    %c0_4 = arith.constant 0 : index
    %3 = vector.load %arg3[%c0_3, %c0_4] : memref<1x128xf32, #tpu.memory_space<vmem>>, vector<1x128xf32>
    %4 = vector.broadcast %3 : vector<1x128xf32> to vector<16x128xf32>
    %5 = arith.addf %2, %4 : vector<16x128xf32>
    %c0_5 = arith.constant 0 : index
    %c0_6 = arith.constant 0 : index
    %6 = vector.load %arg4[%c0_5, %c0_6] : memref<16x128xf32, #tpu.memory_space<vmem>>, vector<16x128xf32>
    tpu.vector_store %arg4[%c0_5, %c0_6], %5 {strides = array<i32>} : memref<16x128xf32, #tpu.memory_space<vmem>>, vector<16x128xf32>,
    return
  }
  func.func @transform_0(%arg0: i32) -> (i32, i32) {
    %c0_i32 = arith.constant 0 : i32
    %c0_i32_0 = arith.constant 0 : i32
    %c0_i32_1 = arith.constant 0 : i32
    return %c0_i32, %c0_i32_0 : i32, i32
  }
  func.func @transform_1(%arg0: i32) -> (i32, i32) {
    %c0_i32 = arith.constant 0 : i32
    %c0_i32_0 = arith.constant 0 : i32
    %c0_i32_1 = arith.constant 0 : i32
    return %c0_i32, %c0_i32_0 : i32, i32
  }
  func.func @transform_2(%arg0: i32) -> (i32, i32) {
    %c0_i32 = arith.constant 0 : i32
    %c0_i32_0 = arith.constant 0 : i32
    %c0_i32_1 = arith.constant 0 : i32
    return %c0_i32, %c0_i32_0 : i32, i32
  }
  func.func @transform_3(%arg0: i32) -> (i32, i32) {
    %c0_i32 = arith.constant 0 : i32
    %c0_i32_0 = arith.constant 0 : i32
    %c0_i32_1 = arith.constant 0 : i32
    return %c0_i32, %c0_i32_0 : i32, i32
  }
}

</mosaic_0001>

<llo_original>
// kernel: tpu_custom_call.1
$region0: #{tpu_custom_call.1}
  #allocation0 [shape = 'u32[]', space=smem, size = 0x4, offset = 0x4, fixed_abs, tag = 'smem constant byte address 0x4 - core index']
  #allocation1 [shape = 'u32[72,128]{1,0:T(1,128)}', space=vmem, size = 0x9000, scoped, tag = 'internal scratch']
  %s0 = inlined_call_operand.hbm [shape: bf16[16,16], index: 0, kind: input, shape index: {}]
  %s1 = inlined_call_operand.hbm [shape: bf16[16,128], index: 1, kind: input, shape index: {}]
  %s2 = inlined_call_operand.vmem [shape: f32[1,128], index: 2, kind: input, shape index: {}]
  %s3 = inlined_call_operand.hbm [shape: f32[16,128], index: 3, kind: output, shape index: {}]
  %s4 = sld [smem:[#allocation0]]
  $region30: #{tpu_custom_call.1} parent=0
    _
  %s6 = ssub.s32 1, %s4
  %s7 = scalar_select 0, %s6, %s4
  $region1: #{tpu_custom_call.1} parent=0
    #allocation2 [shape = 'u8[4096]{0}', space=vmem, size = 0x1000, scoped, tag = 'input window, operand 0, single buffered']
    #allocation3 [shape = 's32[1]{0}', space=sflag, size = 0x4, scoped, tag = 'scoped memory for tpu_custom_call.1']
    #allocation4 [shape = 's32[1]{0}', space=sflag, size = 0x4, scoped, tag = 'scoped memory for tpu_custom_call.1']
    #allocation5 [shape = 'u8[4096]{0}', space=vmem, size = 0x1000, scoped, tag = 'input window, operand 1, single buffered']
    #allocation6 [shape = 's32[1]{0}', space=sflag, size = 0x4, scoped, tag = 'scoped memory for tpu_custom_call.1']
    #allocation7 [shape = 'u8[8192]{0}', space=vmem, size = 0x2000, scoped, tag = 'output window, operand 0, single buffered']
    %8 = vsyncpa [#allocation3], 0
    %9 = vsyncpa [#allocation6], 0
    %10 = vsyncpa [#allocation4], 0
    // Predicated region
    $region2: #{tpu_custom_call.1} parent=1 // pred_check
      _
    $region3: #{tpu_custom_call.1} parent=1 // pred_check_branch
      %12 = sbr.rel (0) target = $region5
    $region4: #{tpu_custom_call.1} parent=1 // pred_region
      %14 = vsyncadd [#allocation3], 0
      %s15 = sshll.u32 %s0, 4
      %s16 = int_to_ptr.hbm [resolvable:$true] %s15
      %s17 = sshll.u32 [#allocation2], 4
      %s18 = int_to_ptr.vmem [resolvable:$true] %s17
      %23 = dma.hbm_to_vmem [thread:$0]  %s16, 128, %s18, [#allocation3], 64, 64, 4
    $region5: #{tpu_custom_call.1} parent=1 // pred_fallthru
      _
    // Predicated region
    $region6: #{tpu_custom_call.1} parent=1 // pred_check
      _
    $region7: #{tpu_custom_call.1} parent=1 // pred_check_branch
      %25 = sbr.rel (0) target = $region9
    $region8: #{tpu_custom_call.1} parent=1 // pred_region
      %27 = vsyncadd [#allocation6], 0
      %s28 = sshll.u32 %s1, 4
      %s29 = int_to_ptr.hbm [resolvable:$true] %s28
      %s30 = sshll.u32 [#allocation5], 4
      %s31 = int_to_ptr.vmem [resolvable:$true] %s30
      %36 = dma.hbm_to_vmem [thread:$0]  %s29, 128, %s31, [#allocation6], 64, 64, 4
    $region9: #{tpu_custom_call.1} parent=1 // pred_fallthru
      _
    // Predicated region
    $region10: #{tpu_custom_call.1} parent=1 // pred_check
      _
    $region11: #{tpu_custom_call.1} parent=1 // pred_check_branch
      %38 = sbr.rel (0) target = $region13
    $region12: #{tpu_custom_call.1} parent=1 // pred_region
      _
    $region13: #{tpu_custom_call.1} parent=1 // pred_fallthru
      _
    // Predicated region
    $region14: #{tpu_custom_call.1} parent=1 // pred_check
      _
    $region15: #{tpu_custom_call.1} parent=1 // pred_check_branch
      %40 = sbr.rel (0) target = $region17
    $region16: #{tpu_custom_call.1} parent=1 // pred_region
      %42 = dma.done [#allocation3], 128
    $region17: #{tpu_custom_call.1} parent=1 // pred_fallthru
      _
    // Predicated region
    $region18: #{tpu_custom_call.1} parent=1 // pred_check
      _
    $region19: #{tpu_custom_call.1} parent=1 // pred_check_branch
      %44 = sbr.rel (0) target = $region21
    $region20: #{tpu_custom_call.1} parent=1 // pred_region
      %46 = dma.done [#allocation6], 128
    $region21: #{tpu_custom_call.1} parent=1 // pred_fallthru
      _
    %v48 = vld [vmem:[#allocation2] sm:$0xf]
    %v49 = vld [vmem:[#allocation2 + $0x4] sm:$0xf]
    %v50 = vld [vmem:[#allocation5] sm:$0xf]
    %v51 = vld [vmem:[#allocation5 + $0x4] sm:$0xf]
    %v52 = vld [vmem:[%s2] sm:$0x1]
    %v54 = vperm.slane %v52, 0
    %v58 = vunpack.c.l.b16 %v48
    %v59 = vunpack.c.l.b16 %v49
    %v60 = vpack.c.b16 %v59, %v58
    %v63 = vunpack.c.l.b16 %v50
    %v64 = vunpack.c.l.b16 %v51
    %v65 = vpack.c.b16 %v64, %v63
    %vm67 = vcmask 130048
    %v69 = vsel %vm67, %v60, 0
    %71 = vmatpush.bf16.msra.mxu0 0
    %72 = vmatpush.bf16.msra.mxu0 0
    %73 = vmatpush.bf16.msra.mxu0 0
    %74 = vmatpush.bf16.msra.mxu0 0
    %75 = vmatpush.bf16.msra.mxu0 0
    %76 = vmatpush.bf16.msra.mxu0 0
    %77 = vmatpush.bf16.msra.mxu0 0
    %78 = vmatpush.bf16.msra.mxu0 %v65
    %79 = vmatmul.bf16.gmra.mxu0 %v69
    %v80 = vpop.f32.mrf.mxu0
    %v81 = vadd.f32 %v54, %v80
    %v82 = vpop.f32.mrf.mxu0
    %v83 = vadd.f32 %v54, %v82
    %84 = vdwg.mxu0
    %85 = vst [vmem:[#allocation7] sm:$0xff] %v81
    %86 = vst [vmem:[#allocation7 + $0x8] sm:$0xff] %v83
    // Predicated region
    $region22: #{tpu_custom_call.1} parent=1 // pred_check
      _
    $region23: #{tpu_custom_call.1} parent=1 // pred_check_branch
      %88 = sbr.rel (0) target = $region25
    $region24: #{tpu_custom_call.1} parent=1 // pred_region
      %90 = vsyncadd [#allocation4], 0
      %s91 = sshll.u32 [#allocation7], 4
      %s92 = int_to_ptr.vmem [resolvable:$true] %s91
      %s93 = sshll.u32 %s3, 4
      %s94 = int_to_ptr.hbm [resolvable:$true] %s93
      %99 = dma.vmem_to_hbm [thread:$0]  %s92, 256, %s94, [#allocation4], 128, 128, 8
    $region25: #{tpu_custom_call.1} parent=1 // pred_fallthru
      _
    // Predicated region
    $region26: #{tpu_custom_call.1} parent=1 // pred_check
      _
    $region27: #{tpu_custom_call.1} parent=1 // pred_check_branch
      %101 = sbr.rel (0) target = $region29
    $region28: #{tpu_custom_call.1} parent=1 // pred_region
      %103 = dma.done [#allocation4], 256
    $region29: #{tpu_custom_call.1} parent=1 // pred_fallthru
      _
    %104 = vsyncpa [#allocation3], 1
    %105 = vsyncpa [#allocation6], 1
    %106 = vsyncpa [#allocation4], 1

</llo_original>
